<compile_context>
chip_gen: v7x
topology: tpu7x:2x2x1
jax: 0.10.0
libtpu: 0.0.40
codegen_flags: <defaults>
</compile_context>

<pallas_src>
import functools

import jax
import jax.numpy as jnp
from jax import lax
from jax.experimental import pallas as pl
from jax.experimental.pallas import tpu as pltpu

EPS = 1e-5  # nn.BatchNorm2d default eps


# ------------------------------------------------------------------ Pallas kernels

def _conv1_stats_kernel(x_ref, w_ref, y_ref, s_ref, q_ref, *, rows_per_img):
    """conv1 (3x3, stride 2, pad 1) for a block of images + BN partial sums.

    x_ref : (2, M, W*Cin) f32    plane 0 = even input rows, plane 1 = odd input rows,
                                 images stacked along the row (M) axis.
    w_ref : (3, W*Cin, W1*C1) bf16 banded weights, one per kernel row dy.
    y_ref : (M, W1*C1) bf16      conv1 output, rows = (image, out-row), lanes = (wo, c).
    s_ref : (1, 1, W1*C1) f32    per-block sums over rows (BN partial).
    q_ref : (1, 1, W1*C1) f32    per-block sums of squares over rows.
    """
    m = y_ref.shape[0]
    kl = x_ref.shape[-1]
    x_even = x_ref[0]
    x_odd = x_ref[1]

    # dy = 0 uses the previous odd input row; the first output row of every image
    # reads the top zero pad instead (mask handles image boundaries in the block).
    shifted = jnp.concatenate(
        [jnp.zeros((1, kl), jnp.float32), x_odd[:m - 1, :]], axis=0)
    row_in_img = lax.broadcasted_iota(jnp.int32, (m, 1), 0) % rows_per_img
    p_dy0 = jnp.where(row_in_img == 0, 0.0, shifted)

    acc = None
    for dy, piece in enumerate((p_dy0, x_even, x_odd)):
        part = jnp.dot(piece.astype(jnp.bfloat16), w_ref[dy],
                       preferred_element_type=jnp.float32)
        acc = part if acc is None else acc + part

    y_ref[...] = acc.astype(y_ref.dtype)
    s_ref[0] = jnp.sum(acc, axis=0, keepdims=True)
    q_ref[0] = jnp.sum(acc * acc, axis=0, keepdims=True)


def _bn_relu_conv2_kernel(y_ref, s_ref, t_ref, w_ref, prev_ref, o_ref, *, rows_per_img):
    """Fused BN affine (single FMA) + ReLU + conv2 (3x3, stride 2, pad 1).

    y_ref : (2, Mh, W1*C1) bf16   conv1 output, plane 0/1 = even/odd output rows.
    s_ref/t_ref : (1, W1*C1) f32  folded BN scale / shift, tiled along lanes.
    w_ref : (3, W1*C1, W2*C2) bf16 banded conv2 weights.
    prev_ref : (2, Mh, W1*C1) f32 post-BN/ReLU activation (the `prev_scale` output).
    o_ref : (Mh, W2*C2) f32       conv2 output, rows = (image, out-row).
    """
    mh = o_ref.shape[0]
    c1l = y_ref.shape[-1]
    scale = s_ref[...]
    shift = t_ref[...]
    # BN + ReLU kept in f32 (v5e has no bf16 VPU); the bf16 cast happens at the MXU.
    act_e = jnp.maximum(y_ref[0].astype(jnp.float32) * scale + shift, 0.0)
    act_o = jnp.maximum(y_ref[1].astype(jnp.float32) * scale + shift, 0.0)
    prev_ref[0] = act_e
    prev_ref[1] = act_o

    # dy = 0 uses the previous odd activation row; first output row of each image
    # reads the top zero pad instead.
    shifted = jnp.concatenate(
        [jnp.zeros((1, c1l), jnp.float32), act_o[:mh - 1, :]], axis=0)
    row_in_img = lax.broadcasted_iota(jnp.int32, (mh, 1), 0) % rows_per_img
    p_dy0 = jnp.where(row_in_img == 0, 0.0, shifted)

    acc = None
    for dy, piece in enumerate((p_dy0, act_e, act_o)):
        part = jnp.dot(piece.astype(jnp.bfloat16), w_ref[dy],
                       preferred_element_type=jnp.float32)
        acc = part if acc is None else acc + part
    o_ref[...] = acc


# ------------------------------------------------------------------ JAX glue

def _banded_weights(w_oihw, w_in, w_out):
    """PyTorch (Cout, Cin, 3, 3) conv weight -> (3, w_in*Cin, w_out*Cout) banded
    matrices (one per kernel row dy) for the stride-2, pad-1 conv-as-matmul.
    Row (wcol*Cin + ci) feeds output lane (wo*Cout + co) iff dx = wcol + 1 - 2*wo
    is in {0, 1, 2}; spatial zero padding contributes no rows at all."""
    cout, cin, kh, kw = w_oihw.shape
    assert (kh, kw) == (3, 3) and w_in == 2 * w_out
    wt = jnp.transpose(w_oihw.astype(jnp.float32), (2, 3, 1, 0))  # (dy, dx, Cin, Cout)
    bands = jnp.zeros((3, w_in * cin, w_out * cout), jnp.float32)
    for dy in range(3):
        for wo in range(w_out):
            for dx in range(3):
                wcol = 2 * wo + dx - 1
                if 0 <= wcol < w_in:
                    bands = bands.at[dy,
                                     wcol * cin:(wcol + 1) * cin,
                                     wo * cout:(wo + 1) * cout].set(wt[dy, dx])
    return bands.astype(jnp.bfloat16)


def _pick_batch_block(n, rows_per_img, row_align=16, target_rows=256):
    """Images per grid step: the block row count must be a multiple of `row_align`
    (bf16 sublane tile) or cover the full array; prefer >=2 grid steps (megacore)
    and an MXU M of ~target_rows."""
    divs = [d for d in range(1, n + 1) if n % d == 0]
    valid = [d for d in divs if (d * rows_per_img) % row_align == 0 or d == n]
    pref = [d for d in valid if n // d >= 2] or valid
    fits = [d for d in pref if d * rows_per_img <= target_rows]
    return max(fits) if fits else min(pref)


def densenet_initial_layers(x_nchw, w1, gamma, beta, w2):
    """conv1(s2) -> BatchNorm(batch stats) -> ReLU -> conv2(s2). Returns (out, prev), NCHW."""
    x = jnp.transpose(x_nchw, (0, 2, 3, 1)).astype(jnp.float32)        # NHWC boundary only
    n, h, w, cin = x.shape
    c1, c2 = w1.shape[0], w2.shape[0]
    h1, w1o = h // 2, w // 2
    h2, w2o = h1 // 2, w1o // 2
    hh = h1 // 2
    assert h % 4 == 0 and w % 4 == 0

    # Row-parity split of the input, images flattened along rows:
    # x_split[s, img*h1 + a, wc*cin + c] = x[img, 2a + s, wc, c]
    x_split = (x.reshape(n, h1, 2, w * cin)
                 .transpose(2, 0, 1, 3)
                 .reshape(2, n * h1, w * cin))

    w1b = _banded_weights(w1, w, w1o)        # (3, W*Cin,  W1*C1)
    w2b = _banded_weights(w2, w1o, w2o)      # (3, W1*C1,  W2*C2)

    # ---- kernel 1: conv1 + per-block BN partial sums (batch-blocked grid) ----
    b1 = _pick_batch_block(n, h1)
    g1 = n // b1
    k1 = functools.partial(_conv1_stats_kernel, rows_per_img=h1)
    y1, psum, psq = pl.pallas_call(
        k1,
        grid=(g1,),
        in_specs=[
            pl.BlockSpec((2, b1 * h1, w * cin), lambda i: (0, i, 0)),
            pl.BlockSpec((3, w * cin, w1o * c1), lambda i: (0, 0, 0)),
        ],
        out_specs=[
            pl.BlockSpec((b1 * h1, w1o * c1), lambda i: (i, 0)),
            pl.BlockSpec((1, 1, w1o * c1), lambda i: (i, 0, 0)),
            pl.BlockSpec((1, 1, w1o * c1), lambda i: (i, 0, 0)),
        ],
        out_shape=(
            jax.ShapeDtypeStruct((n * h1, w1o * c1), jnp.bfloat16),   # y1 stored bf16
            jax.ShapeDtypeStruct((g1, 1, w1o * c1), jnp.float32),
            jax.ShapeDtypeStruct((g1, 1, w1o * c1), jnp.float32),
        ),
        compiler_params=pltpu.CompilerParams(dimension_semantics=("parallel",)),
    )(x_split, w1b)

    # ---- tiny XLA combine: global batch statistics -> folded BN scale/shift ----
    # TODO(synk): E[x^2]-E[x]^2 in f32 can cancel for large-mean activations; use
    # per-block centered partials + Chan combine if bit-parity with torch matters.
    cnt = float(n * h1 * w1o)
    ch_sum = psum.reshape(g1, w1o, c1).sum(axis=(0, 1))
    ch_sq = psq.reshape(g1, w1o, c1).sum(axis=(0, 1))
    mean = ch_sum / cnt
    var = jnp.maximum(ch_sq / cnt - mean * mean, 0.0)      # biased variance (BN norm)
    scale = gamma.astype(jnp.float32) * lax.rsqrt(var + EPS)
    shift = beta.astype(jnp.float32) - mean * scale
    s_tiled = jnp.tile(scale, w1o)[None, :]                # lane = wo*C1 + c
    t_tiled = jnp.tile(shift, w1o)[None, :]

    # Row-parity split of y1 done in the wrapper so neither kernel re-tiles sublanes.
    y1_split = (y1.reshape(n, hh, 2, w1o * c1)
                  .transpose(2, 0, 1, 3)
                  .reshape(2, n * hh, w1o * c1))

    # ---- kernel 2: fused BN affine + ReLU + conv2 (batch-blocked grid) ----
    b2 = _pick_batch_block(n, hh)
    g2 = n // b2
    k2 = functools.partial(_bn_relu_conv2_kernel, rows_per_img=h2)
    prev, out = pl.pallas_call(
        k2,
        grid=(g2,),
        in_specs=[
            pl.BlockSpec((2, b2 * hh, w1o * c1), lambda i: (0, i, 0)),
            pl.BlockSpec((1, w1o * c1), lambda i: (0, 0)),
            pl.BlockSpec((1, w1o * c1), lambda i: (0, 0)),
            pl.BlockSpec((3, w1o * c1, w2o * c2), lambda i: (0, 0, 0)),
        ],
        out_specs=[
            pl.BlockSpec((2, b2 * hh, w1o * c1), lambda i: (0, i, 0)),
            pl.BlockSpec((b2 * h2, w2o * c2), lambda i: (i, 0)),
        ],
        out_shape=(
            jax.ShapeDtypeStruct((2, n * hh, w1o * c1), jnp.float32),
            jax.ShapeDtypeStruct((n * h2, w2o * c2), jnp.float32),
        ),
        compiler_params=pltpu.CompilerParams(dimension_semantics=("parallel",)),
    )(y1_split, s_tiled, t_tiled, w2b)

    out_nchw = jnp.transpose(out.reshape(n, h2, w2o, c2), (0, 3, 1, 2))
    prev_nhwc = (prev.reshape(2, n, hh, w1o, c1)
                     .transpose(1, 2, 0, 3, 4)
                     .reshape(n, h1, w1o, c1))
    prev_nchw = jnp.transpose(prev_nhwc, (0, 3, 1, 2))
    return out_nchw, prev_nchw


# ------------------------------------------------------------------ reference & demo

def _reference(x, w1, gamma, beta, w2):
    dn = ("NCHW", "OIHW", "NCHW")
    prec = lax.Precision.HIGHEST
    y = lax.conv_general_dilated(x, w1, (2, 2), ((1, 1), (1, 1)),
                                 dimension_numbers=dn, precision=prec)
    mean = y.mean(axis=(0, 2, 3), keepdims=True)
    var = ((y - mean) ** 2).mean(axis=(0, 2, 3), keepdims=True)
    act = (y - mean) * lax.rsqrt(var + EPS)
    act = act * gamma.reshape(1, -1, 1, 1) + beta.reshape(1, -1, 1, 1)
    act = jnp.maximum(act, 0.0)
    out = lax.conv_general_dilated(act, w2, (2, 2), ((1, 1), (1, 1)),
                                   dimension_numbers=dn, precision=prec)
    return out, act


def _kaiming_normal(key, shape):
    # nn.init.kaiming_normal_ default: fan_in mode, gain = sqrt(2)
    fan_in = shape[1] * shape[2] * shape[3]
    std = (2.0 / fan_in) ** 0.5
    return jax.random.normal(key, shape, dtype=jnp.float32) * std


if __name__ == "__main__":
    growth_rate = 8
    c_next, c_out = 2 * growth_rate, 4 * growth_rate     # 16, 32

    key = jax.random.PRNGKey(0)
    kx, kw1, kw2 = jax.random.split(key, 3)

    x = jax.random.normal(kx, (2, 3, 16, 16), dtype=jnp.float32)   # NCHW input
    w1 = _kaiming_normal(kw1, (c_next, 3, 3, 3))                   # conv1 weight
    w2 = _kaiming_normal(kw2, (c_out, c_next, 3, 3))               # conv2 weight
    gamma = jnp.ones((c_next,), jnp.float32)                       # BN weight
    beta = jnp.zeros((c_next,), jnp.float32)                       # BN bias

    out, prev = jax.jit(densenet_initial_layers)(x, w1, gamma, beta, w2)
    jax.block_until_ready((out, prev))

    assert out.shape == (2, c_out, 4, 4), out.shape
    assert prev.shape == (2, c_next, 8, 8), prev.shape
    assert bool(jnp.all(prev >= 0.0))                              # ReLU applied

    out_exp, prev_exp = _reference(x, w1, gamma, beta, w2)
    assert bool(jnp.allclose(prev, prev_exp, rtol=5e-2, atol=5e-2)), \
        float(jnp.max(jnp.abs(prev - prev_exp)))
    assert bool(jnp.allclose(out, out_exp, rtol=5e-2, atol=5e-2)), \
        float(jnp.max(jnp.abs(out - out_exp)))
    print("KERNEL_OK")
</pallas_src>

<mosaic_0001>
module attributes {stable_mosaic.version = 11 : i64} {
  func.func @_conv1_stats_kernel(%arg0: i32, %arg1: memref<2x16x48xf32, #tpu.memory_space<vmem>>, %arg2: memref<3x48x128xbf16, #tpu.memory_space<vmem>>, %arg3: memref<16x128xbf16, #tpu.memory_space<vmem>>, %arg4: memref<1x1x128xf32, #tpu.memory_space<vmem>>, %arg5: memref<1x1x128xf32, #tpu.memory_space<vmem>>) attributes {dimension_semantics = [#tpu.dimension_semantics<parallel>], iteration_bounds = array<i64: 1>, scalar_prefetch = 0 : i64, scratch_operands = 0 : i64, tpu.core_type = #tpu.core_type<tc>, window_params = [{transform_indices = @transform_0, window_bounds = array<i64: 2, 16, 48>}, {pipeline_mode = #tpu.pipeline_mode<synchronous>, transform_indices = @transform_1, window_bounds = array<i64: 3, 48, 128>}, {transform_indices = @transform_2, window_bounds = array<i64: 16, 128>}, {transform_indices = @transform_3, window_bounds = array<i64: 1, 1, 128>}, {transform_indices = @transform_4, window_bounds = array<i64: 1, 1, 128>}]} {
    %c0 = arith.constant 0 : index
    %c0_0 = arith.constant 0 : index
    %c0_1 = arith.constant 0 : index
    %0 = vector.load %arg1[%c0, %c0_0, %c0_1] : memref<2x16x48xf32, #tpu.memory_space<vmem>>, vector<1x16x48xf32>
    %1 = vector.shape_cast %0 : vector<1x16x48xf32> to vector<16x48xf32>
    %c1 = arith.constant 1 : index
    %c0_2 = arith.constant 0 : index
    %c0_3 = arith.constant 0 : index
    %2 = vector.load %arg1[%c1, %c0_2, %c0_3] : memref<2x16x48xf32, #tpu.memory_space<vmem>>, vector<1x16x48xf32>
    %3 = vector.shape_cast %2 : vector<1x16x48xf32> to vector<16x48xf32>
    %cst = arith.constant 0.000000e+00 : f32
    %4 = vector.broadcast %cst : f32 to vector<1x48xf32>
    %5 = vector.extract_strided_slice %3 {offsets = [0, 0], sizes = [15, 48], strides = [1, 1]} : vector<16x48xf32> to vector<15x48xf32>
    %6 = tpu.concatenate %4, %5 in 0 : vector<1x48xf32>, vector<15x48xf32> -> vector<16x48xf32>
    %7 = tpu.iota {dimensions = array<i32: 0>} : vector<16x1xi32>
    %c8_i32 = arith.constant 8 : i32
    %c0_i32 = arith.constant 0 : i32
    %8 = arith.cmpi eq, %c8_i32, %c0_i32 : i32
    %c1_i32 = arith.constant 1 : i32
    %9 = arith.select %8, %c1_i32, %c8_i32 : i32
    %10 = vector.broadcast %9 : i32 to vector<16x1xi32>
    %11 = arith.remsi %7, %10 : vector<16x1xi32>
    %c0_i32_4 = arith.constant 0 : i32
    %12 = vector.broadcast %c0_i32_4 : i32 to vector<16x1xi32>
    %13 = arith.cmpi ne, %11, %12 : vector<16x1xi32>
    %c0_i32_5 = arith.constant 0 : i32
    %14 = vector.broadcast %c0_i32_5 : i32 to vector<16x1xi32>
    %15 = arith.cmpi slt, %11, %14 : vector<16x1xi32>
    %c0_i32_6 = arith.constant 0 : i32
    %16 = arith.cmpi slt, %9, %c0_i32_6 : i32
    %17 = vector.broadcast %16 : i1 to vector<16x1xi1>
    %18 = vector.broadcast %17 : vector<16x1xi1> to vector<16x1xi1>
    %19 = arith.xori %15, %18 : vector<16x1xi1>
    %20 = arith.andi %19, %13 : vector<16x1xi1>
    %21 = vector.broadcast %9 : i32 to vector<16x1xi32>
    %22 = arith.addi %11, %21 : vector<16x1xi32>
    %23 = arith.select %20, %22, %11 : vector<16x1xi1>, vector<16x1xi32>
    %c0_i32_7 = arith.constant 0 : i32
    %24 = vector.broadcast %c0_i32_7 : i32 to vector<16x1xi32>
    %25 = arith.cmpi eq, %23, %24 : vector<16x1xi32>
    %cst_8 = arith.constant 0.000000e+00 : f32
    %26 = vector.shape_cast %25 : vector<16x1xi1> to vector<16x1xi1>
    %27 = vector.broadcast %26 : vector<16x1xi1> to vector<16x48xi1>
    %28 = vector.broadcast %cst_8 : f32 to vector<16x48xf32>
    %29 = arith.select %27, %28, %6 : vector<16x48xi1>, vector<16x48xf32>
    %30 = arith.truncf %29 : vector<16x48xf32> to vector<16x48xbf16>
    %c0_9 = arith.constant 0 : index
    %c0_10 = arith.constant 0 : index
    %c0_11 = arith.constant 0 : index
    %31 = vector.load %arg2[%c0_9, %c0_10, %c0_11] : memref<3x48x128xbf16, #tpu.memory_space<vmem>>, vector<1x48x128xbf16>
    %32 = vector.shape_cast %31 : vector<1x48x128xbf16> to vector<48x128xbf16>
    %cst_12 = arith.constant dense<0.000000e+00> : vector<16x128xf32>
    %33 = tpu.matmul %30, %32, %cst_12 {dimension_numbers = #tpu.dot_dimension_numbers<[1], [0], [0], [1], [0, 0, 1, 1], [], []>} : vector<16x48xbf16>, vector<48x128xbf16>, vector<16x128xf32> -> vector<16x128xf32>
    %34 = arith.truncf %1 : vector<16x48xf32> to vector<16x48xbf16>
    %c1_13 = arith.constant 1 : index
    %c0_14 = arith.constant 0 : index
    %c0_15 = arith.constant 0 : index
    %35 = vector.load %arg2[%c1_13, %c0_14, %c0_15] : memref<3x48x128xbf16, #tpu.memory_space<vmem>>, vector<1x48x128xbf16>
    %36 = vector.shape_cast %35 : vector<1x48x128xbf16> to vector<48x128xbf16>
    %cst_16 = arith.constant dense<0.000000e+00> : vector<16x128xf32>
    %37 = tpu.matmul %34, %36, %cst_16 {dimension_numbers = #tpu.dot_dimension_numbers<[1], [0], [0], [1], [0, 0, 1, 1], [], []>} : vector<16x48xbf16>, vector<48x128xbf16>, vector<16x128xf32> -> vector<16x128xf32>
    %38 = arith.addf %33, %37 : vector<16x128xf32>
    %39 = arith.truncf %3 : vector<16x48xf32> to vector<16x48xbf16>
    %c2 = arith.constant 2 : index
    %c0_17 = arith.constant 0 : index
    %c0_18 = arith.constant 0 : index
    %40 = vector.load %arg2[%c2, %c0_17, %c0_18] : memref<3x48x128xbf16, #tpu.memory_space<vmem>>, vector<1x48x128xbf16>
    %41 = vector.shape_cast %40 : vector<1x48x128xbf16> to vector<48x128xbf16>
    %cst_19 = arith.constant dense<0.000000e+00> : vector<16x128xf32>
    %42 = tpu.matmul %39, %41, %cst_19 {dimension_numbers = #tpu.dot_dimension_numbers<[1], [0], [0], [1], [0, 0, 1, 1], [], []>} : vector<16x48xbf16>, vector<48x128xbf16>, vector<16x128xf32> -> vector<16x128xf32>
    %43 = arith.addf %38, %42 : vector<16x128xf32>
    %44 = arith.truncf %43 : vector<16x128xf32> to vector<16x128xbf16>
    %c0_20 = arith.constant 0 : index
    %c0_21 = arith.constant 0 : index
    %45 = vector.load %arg3[%c0_20, %c0_21] : memref<16x128xbf16, #tpu.memory_space<vmem>>, vector<16x128xbf16>
    tpu.vector_store %arg3[%c0_20, %c0_21], %44 {strides = array<i32>} : memref<16x128xbf16, #tpu.memory_space<vmem>>, vector<16x128xbf16>,
    %cst_22 = arith.constant dense<0.000000e+00> : vector<128xf32>
    %46 = vector.multi_reduction <add>, %43, %cst_22 [0] : vector<16x128xf32> to vector<128xf32>
    %47 = vector.shape_cast %46 : vector<128xf32> to vector<1x128xf32>
    %c0_23 = arith.constant 0 : index
    %c0_24 = arith.constant 0 : index
    %c0_25 = arith.constant 0 : index
    %48 = vector.load %arg4[%c0_23, %c0_24, %c0_25] : memref<1x1x128xf32, #tpu.memory_space<vmem>>, vector<1x1x128xf32>
    %49 = vector.shape_cast %48 : vector<1x1x128xf32> to vector<1x128xf32>
    %50 = vector.shape_cast %47 : vector<1x128xf32> to vector<1x1x128xf32>
    tpu.vector_store %arg4[%c0_23, %c0_24, %c0_25], %50 {strides = array<i32>} : memref<1x1x128xf32, #tpu.memory_space<vmem>>, vector<1x1x128xf32>,
    %51 = arith.mulf %43, %43 : vector<16x128xf32>
    %cst_26 = arith.constant dense<0.000000e+00> : vector<128xf32>
    %52 = vector.multi_reduction <add>, %51, %cst_26 [0] : vector<16x128xf32> to vector<128xf32>
    %53 = vector.shape_cast %52 : vector<128xf32> to vector<1x128xf32>
    %c0_27 = arith.constant 0 : index
    %c0_28 = arith.constant 0 : index
    %c0_29 = arith.constant 0 : index
    %54 = vector.load %arg5[%c0_27, %c0_28, %c0_29] : memref<1x1x128xf32, #tpu.memory_space<vmem>>, vector<1x1x128xf32>
    %55 = vector.shape_cast %54 : vector<1x1x128xf32> to vector<1x128xf32>
    %56 = vector.shape_cast %53 : vector<1x128xf32> to vector<1x1x128xf32>
    tpu.vector_store %arg5[%c0_27, %c0_28, %c0_29], %56 {strides = array<i32>} : memref<1x1x128xf32, #tpu.memory_space<vmem>>, vector<1x1x128xf32>,
    return
  }
  func.func @transform_0(%arg0: i32) -> (i32, i32, i32) {
    %c0_i32 = arith.constant 0 : i32
    %c0_i32_0 = arith.constant 0 : i32
    %c0_i32_1 = arith.constant 0 : i32
    return %c0_i32, %arg0, %c0_i32_0 : i32, i32, i32
  }
  func.func @transform_1(%arg0: i32) -> (i32, i32, i32) {
    %c0_i32 = arith.constant 0 : i32
    %c0_i32_0 = arith.constant 0 : i32
    %c0_i32_1 = arith.constant 0 : i32
    %c0_i32_2 = arith.constant 0 : i32
    return %c0_i32, %c0_i32_0, %c0_i32_1 : i32, i32, i32
  }
  func.func @transform_2(%arg0: i32) -> (i32, i32) {
    %c0_i32 = arith.constant 0 : i32
    %c0_i32_0 = arith.constant 0 : i32
    return %arg0, %c0_i32 : i32, i32
  }
  func.func @transform_3(%arg0: i32) -> (i32, i32, i32) {
    %c0_i32 = arith.constant 0 : i32
    %c0_i32_0 = arith.constant 0 : i32
    %c0_i32_1 = arith.constant 0 : i32
    return %arg0, %c0_i32, %c0_i32_0 : i32, i32, i32
  }
  func.func @transform_4(%arg0: i32) -> (i32, i32, i32) {
    %c0_i32 = arith.constant 0 : i32
    %c0_i32_0 = arith.constant 0 : i32
    %c0_i32_1 = arith.constant 0 : i32
    return %arg0, %c0_i32, %c0_i32_0 : i32, i32, i32
  }
}

module attributes {stable_mosaic.version = 11 : i64} {
  func.func @_bn_relu_conv2_kernel(%arg0: i32, %arg1: memref<2x8x128xbf16, #tpu.memory_space<vmem>>, %arg2: memref<1x128xf32, #tpu.memory_space<vmem>>, %arg3: memref<1x128xf32, #tpu.memory_space<vmem>>, %arg4: memref<3x128x128xbf16, #tpu.memory_space<vmem>>, %arg5: memref<2x8x128xf32, #tpu.memory_space<vmem>>, %arg6: memref<8x128xf32, #tpu.memory_space<vmem>>) attributes {dimension_semantics = [#tpu.dimension_semantics<parallel>], iteration_bounds = array<i64: 1>, scalar_prefetch = 0 : i64, scratch_operands = 0 : i64, tpu.core_type = #tpu.core_type<tc>, window_params = [{transform_indices = @transform_0, window_bounds = array<i64: 2, 8, 128>}, {pipeline_mode = #tpu.pipeline_mode<synchronous>, transform_indices = @transform_1, window_bounds = array<i64: 1, 128>}, {pipeline_mode = #tpu.pipeline_mode<synchronous>, transform_indices = @transform_2, window_bounds = array<i64: 1, 128>}, {pipeline_mode = #tpu.pipeline_mode<synchronous>, transform_indices = @transform_3, window_bounds = array<i64: 3, 128, 128>}, {transform_indices = @transform_4, window_bounds = array<i64: 2, 8, 128>}, {transform_indices = @transform_5, window_bounds = array<i64: 8, 128>}]} {
    %c0 = arith.constant 0 : index
    %c0_0 = arith.constant 0 : index
    %0 = vector.load %arg2[%c0, %c0_0] : memref<1x128xf32, #tpu.memory_space<vmem>>, vector<1x128xf32>
    %c0_1 = arith.constant 0 : index
    %c0_2 = arith.constant 0 : index
    %1 = vector.load %arg3[%c0_1, %c0_2] : memref<1x128xf32, #tpu.memory_space<vmem>>, vector<1x128xf32>
    %c0_3 = arith.constant 0 : index
    %c0_4 = arith.constant 0 : index
    %c0_5 = arith.constant 0 : index
    %2 = vector.load %arg1[%c0_3, %c0_4, %c0_5] : memref<2x8x128xbf16, #tpu.memory_space<vmem>>, vector<1x8x128xbf16>
    %3 = vector.shape_cast %2 : vector<1x8x128xbf16> to vector<8x128xbf16>
    %4 = arith.extf %3 : vector<8x128xbf16> to vector<8x128xf32>
    %5 = vector.broadcast %0 : vector<1x128xf32> to vector<8x128xf32>
    %6 = arith.mulf %4, %5 : vector<8x128xf32>
    %7 = vector.broadcast %1 : vector<1x128xf32> to vector<8x128xf32>
    %8 = arith.addf %6, %7 : vector<8x128xf32>
    %cst = arith.constant 0.000000e+00 : f32
    %9 = vector.broadcast %cst : f32 to vector<8x128xf32>
    %10 = arith.maximumf %8, %9 : vector<8x128xf32>
    %c1 = arith.constant 1 : index
    %c0_6 = arith.constant 0 : index
    %c0_7 = arith.constant 0 : index
    %11 = vector.load %arg1[%c1, %c0_6, %c0_7] : memref<2x8x128xbf16, #tpu.memory_space<vmem>>, vector<1x8x128xbf16>
    %12 = vector.shape_cast %11 : vector<1x8x128xbf16> to vector<8x128xbf16>
    %13 = arith.extf %12 : vector<8x128xbf16> to vector<8x128xf32>
    %14 = vector.broadcast %0 : vector<1x128xf32> to vector<8x128xf32>
    %15 = arith.mulf %13, %14 : vector<8x128xf32>
    %16 = vector.broadcast %1 : vector<1x128xf32> to vector<8x128xf32>
    %17 = arith.addf %15, %16 : vector<8x128xf32>
    %cst_8 = arith.constant 0.000000e+00 : f32
    %18 = vector.broadcast %cst_8 : f32 to vector<8x128xf32>
    %19 = arith.maximumf %17, %18 : vector<8x128xf32>
    %c0_9 = arith.constant 0 : index
    %c0_10 = arith.constant 0 : index
    %c0_11 = arith.constant 0 : index
    %20 = vector.load %arg5[%c0_9, %c0_10, %c0_11] : memref<2x8x128xf32, #tpu.memory_space<vmem>>, vector<1x8x128xf32>
    %21 = vector.shape_cast %20 : vector<1x8x128xf32> to vector<8x128xf32>
    %22 = vector.shape_cast %10 : vector<8x128xf32> to vector<1x8x128xf32>
    tpu.vector_store %arg5[%c0_9, %c0_10, %c0_11], %22 {strides = array<i32>} : memref<2x8x128xf32, #tpu.memory_space<vmem>>, vector<1x8x128xf32>,
    %c1_12 = arith.constant 1 : index
    %c0_13 = arith.constant 0 : index
    %c0_14 = arith.constant 0 : index
    %23 = vector.load %arg5[%c1_12, %c0_13, %c0_14] : memref<2x8x128xf32, #tpu.memory_space<vmem>>, vector<1x8x128xf32>
    %24 = vector.shape_cast %23 : vector<1x8x128xf32> to vector<8x128xf32>
    %25 = vector.shape_cast %19 : vector<8x128xf32> to vector<1x8x128xf32>
    tpu.vector_store %arg5[%c1_12, %c0_13, %c0_14], %25 {strides = array<i32>} : memref<2x8x128xf32, #tpu.memory_space<vmem>>, vector<1x8x128xf32>,
    %cst_15 = arith.constant 0.000000e+00 : f32
    %26 = vector.broadcast %cst_15 : f32 to vector<1x128xf32>
    %27 = vector.extract_strided_slice %19 {offsets = [0, 0], sizes = [7, 128], strides = [1, 1]} : vector<8x128xf32> to vector<7x128xf32>
    %28 = tpu.concatenate %26, %27 in 0 : vector<1x128xf32>, vector<7x128xf32> -> vector<8x128xf32>
    %29 = tpu.iota {dimensions = array<i32: 0>} : vector<8x1xi32>
    %c4_i32 = arith.constant 4 : i32
    %c0_i32 = arith.constant 0 : i32
    %30 = arith.cmpi eq, %c4_i32, %c0_i32 : i32
    %c1_i32 = arith.constant 1 : i32
    %31 = arith.select %30, %c1_i32, %c4_i32 : i32
    %32 = vector.broadcast %31 : i32 to vector<8x1xi32>
    %33 = arith.remsi %29, %32 : vector<8x1xi32>
    %c0_i32_16 = arith.constant 0 : i32
    %34 = vector.broadcast %c0_i32_16 : i32 to vector<8x1xi32>
    %35 = arith.cmpi ne, %33, %34 : vector<8x1xi32>
    %c0_i32_17 = arith.constant 0 : i32
    %36 = vector.broadcast %c0_i32_17 : i32 to vector<8x1xi32>
    %37 = arith.cmpi slt, %33, %36 : vector<8x1xi32>
    %c0_i32_18 = arith.constant 0 : i32
    %38 = arith.cmpi slt, %31, %c0_i32_18 : i32
    %39 = vector.broadcast %38 : i1 to vector<8x1xi1>
    %40 = vector.broadcast %39 : vector<8x1xi1> to vector<8x1xi1>
    %41 = arith.xori %37, %40 : vector<8x1xi1>
    %42 = arith.andi %41, %35 : vector<8x1xi1>
    %43 = vector.broadcast %31 : i32 to vector<8x1xi32>
    %44 = arith.addi %33, %43 : vector<8x1xi32>
    %45 = arith.select %42, %44, %33 : vector<8x1xi1>, vector<8x1xi32>
    %c0_i32_19 = arith.constant 0 : i32
    %46 = vector.broadcast %c0_i32_19 : i32 to vector<8x1xi32>
    %47 = arith.cmpi eq, %45, %46 : vector<8x1xi32>
    %cst_20 = arith.constant 0.000000e+00 : f32
    %48 = vector.shape_cast %47 : vector<8x1xi1> to vector<8x1xi1>
    %49 = vector.broadcast %48 : vector<8x1xi1> to vector<8x128xi1>
    %50 = vector.broadcast %cst_20 : f32 to vector<8x128xf32>
    %51 = arith.select %49, %50, %28 : vector<8x128xi1>, vector<8x128xf32>
    %52 = arith.truncf %51 : vector<8x128xf32> to vector<8x128xbf16>
    %c0_21 = arith.constant 0 : index
    %c0_22 = arith.constant 0 : index
    %c0_23 = arith.constant 0 : index
    %53 = vector.load %arg4[%c0_21, %c0_22, %c0_23] : memref<3x128x128xbf16, #tpu.memory_space<vmem>>, vector<1x128x128xbf16>
    %54 = vector.shape_cast %53 : vector<1x128x128xbf16> to vector<128x128xbf16>
    %cst_24 = arith.constant dense<0.000000e+00> : vector<8x128xf32>
    %55 = tpu.matmul %52, %54, %cst_24 {dimension_numbers = #tpu.dot_dimension_numbers<[1], [0], [0], [1], [0, 0, 1, 1], [], []>} : vector<8x128xbf16>, vector<128x128xbf16>, vector<8x128xf32> -> vector<8x128xf32>
    %56 = arith.truncf %10 : vector<8x128xf32> to vector<8x128xbf16>
    %c1_25 = arith.constant 1 : index
    %c0_26 = arith.constant 0 : index
    %c0_27 = arith.constant 0 : index
    %57 = vector.load %arg4[%c1_25, %c0_26, %c0_27] : memref<3x128x128xbf16, #tpu.memory_space<vmem>>, vector<1x128x128xbf16>
    %58 = vector.shape_cast %57 : vector<1x128x128xbf16> to vector<128x128xbf16>
    %cst_28 = arith.constant dense<0.000000e+00> : vector<8x128xf32>
    %59 = tpu.matmul %56, %58, %cst_28 {dimension_numbers = #tpu.dot_dimension_numbers<[1], [0], [0], [1], [0, 0, 1, 1], [], []>} : vector<8x128xbf16>, vector<128x128xbf16>, vector<8x128xf32> -> vector<8x128xf32>
    %60 = arith.addf %55, %59 : vector<8x128xf32>
    %61 = arith.truncf %19 : vector<8x128xf32> to vector<8x128xbf16>
    %c2 = arith.constant 2 : index
    %c0_29 = arith.constant 0 : index
    %c0_30 = arith.constant 0 : index
    %62 = vector.load %arg4[%c2, %c0_29, %c0_30] : memref<3x128x128xbf16, #tpu.memory_space<vmem>>, vector<1x128x128xbf16>
    %63 = vector.shape_cast %62 : vector<1x128x128xbf16> to vector<128x128xbf16>
    %cst_31 = arith.constant dense<0.000000e+00> : vector<8x128xf32>
    %64 = tpu.matmul %61, %63, %cst_31 {dimension_numbers = #tpu.dot_dimension_numbers<[1], [0], [0], [1], [0, 0, 1, 1], [], []>} : vector<8x128xbf16>, vector<128x128xbf16>, vector<8x128xf32> -> vector<8x128xf32>
    %65 = arith.addf %60, %64 : vector<8x128xf32>
    %c0_32 = arith.constant 0 : index
    %c0_33 = arith.constant 0 : index
    %66 = vector.load %arg6[%c0_32, %c0_33] : memref<8x128xf32, #tpu.memory_space<vmem>>, vector<8x128xf32>
    tpu.vector_store %arg6[%c0_32, %c0_33], %65 {strides = array<i32>} : memref<8x128xf32, #tpu.memory_space<vmem>>, vector<8x128xf32>,
    return
  }
  func.func @transform_0(%arg0: i32) -> (i32, i32, i32) {
    %c0_i32 = arith.constant 0 : i32
    %c0_i32_0 = arith.constant 0 : i32
    %c0_i32_1 = arith.constant 0 : i32
    return %c0_i32, %arg0, %c0_i32_0 : i32, i32, i32
  }
  func.func @transform_1(%arg0: i32) -> (i32, i32) {
    %c0_i32 = arith.constant 0 : i32
    %c0_i32_0 = arith.constant 0 : i32
    %c0_i32_1 = arith.constant 0 : i32
    return %c0_i32, %c0_i32_0 : i32, i32
  }
  func.func @transform_2(%arg0: i32) -> (i32, i32) {
    %c0_i32 = arith.constant 0 : i32
    %c0_i32_0 = arith.constant 0 : i32
    %c0_i32_1 = arith.constant 0 : i32
    return %c0_i32, %c0_i32_0 : i32, i32
  }
  func.func @transform_3(%arg0: i32) -> (i32, i32, i32) {
    %c0_i32 = arith.constant 0 : i32
    %c0_i32_0 = arith.constant 0 : i32
    %c0_i32_1 = arith.constant 0 : i32
    %c0_i32_2 = arith.constant 0 : i32
    return %c0_i32, %c0_i32_0, %c0_i32_1 : i32, i32, i32
  }
  func.func @transform_4(%arg0: i32) -> (i32, i32, i32) {
    %c0_i32 = arith.constant 0 : i32
    %c0_i32_0 = arith.constant 0 : i32
    %c0_i32_1 = arith.constant 0 : i32
    return %c0_i32, %arg0, %c0_i32_0 : i32, i32, i32
  }
  func.func @transform_5(%arg0: i32) -> (i32, i32) {
    %c0_i32 = arith.constant 0 : i32
    %c0_i32_0 = arith.constant 0 : i32
    return %arg0, %c0_i32 : i32, i32
  }
}

</mosaic_0001>

<llo_original>
// kernel: tile.13
$region0: #{tile.13}
  #allocation0 [shape = 's32[1]{0}', space=sflag, size = 0x4, scoped, tag = 'scoped memory for tile.13']
  %s0 = inlined_call_operand.vmem [shape: f32[16], index: 0, kind: input, shape index: {}]
  %s1 = inlined_call_operand.vmem [shape: f32[8,16], index: 1, kind: output, shape index: {}]
  // Predicated region
  $region2: #{tile.13} parent=0 // pred_check
    _
  $region3: #{tile.13} parent=0 // pred_check_branch
    %3 = sbr.rel (0) target = $region5
  $region4: #{tile.13} parent=0 // pred_region
    _
  $region5: #{tile.13} parent=0 // pred_fallthru
    _
  %v4 = vld [vmem:[%s0] ss:$0 sm:$0xff]
  %5 = vst [vmem:[%s1] sm:$0xff] %v4

// kernel: tile.14
$region0: #{tile.14}
  %s0 = inlined_call_operand.vmem [shape: f32[8,16], index: 0, kind: input, shape index: {}]
  %s1 = inlined_call_operand.vmem [shape: f32[1,128], index: 1, kind: output, shape index: {}]
  $region1: #{tile.14} parent=0
    #allocation0 [shape = 'u8[4096]{0}', space=vmem, size = 0x1000, scoped, tag = 'scoped mem for output reshape']
    %v2 = vld [vmem:[%s0] sm:$0x1]
    %vm3 = vcmask 130048
    %4 = vst.msk [vmem:[#allocation0] sm:$0x1] %vm3, %v2
    %s5 = scalar_lea.vmem %s0, 7
    %v6 = vld [vmem:[%s5] sm:$0x1]
    %7 = vrot.lane.b32.xlu0 %v6, 112
    %v8 = vpop.permute.xlu0 %7
    %vm9 = vcmask 1048448
    %10 = vst.msk [vmem:[#allocation0] sm:$0x1] %vm9, %v8
    %s11 = scalar_lea.vmem %s0, 6
    %v12 = vld [vmem:[%s11] sm:$0x1]
    %13 = vrot.lane.b32.xlu0 %v12, 96
    %v14 = vpop.permute.xlu0 %13
    %vm15 = vcmask 917248
    %16 = vst.msk [vmem:[#allocation0] sm:$0x1] %vm15, %v14
    %s17 = scalar_lea.vmem %s0, 5
    %v18 = vld [vmem:[%s17] sm:$0x1]
    %19 = vrot.lane.b32.xlu0 %v18, 80
    %v20 = vpop.permute.xlu0 %19
    %vm21 = vcmask 786048
    %22 = vst.msk [vmem:[#allocation0] sm:$0x1] %vm21, %v20
    %s23 = scalar_lea.vmem %s0, 4
    %v24 = vld [vmem:[%s23] sm:$0x1]
    %25 = vrot.lane.b32.xlu0 %v24, 64
    %v26 = vpop.permute.xlu0 %25
    %vm27 = vcmask 654848
    %28 = vst.msk [vmem:[#allocation0] sm:$0x1] %vm27, %v26
    %s29 = scalar_lea.vmem %s0, 3
    %v30 = vld [vmem:[%s29] sm:$0x1]
    %31 = vrot.lane.b32.xlu0 %v30, 48
    %v32 = vpop.permute.xlu0 %31
    %vm33 = vcmask 523648
    %34 = vst.msk [vmem:[#allocation0] sm:$0x1] %vm33, %v32
    %s35 = scalar_lea.vmem %s0, 2
    %v36 = vld [vmem:[%s35] sm:$0x1]
    %37 = vrot.lane.b32.xlu0 %v36, 32
    %v38 = vpop.permute.xlu0 %37
    %vm39 = vcmask 392448
    %40 = vst.msk [vmem:[#allocation0] sm:$0x1] %vm39, %v38
    %s41 = scalar_lea.vmem %s0, 1
    %v42 = vld [vmem:[%s41] sm:$0x1]
    %43 = vrot.lane.b32.xlu0 %v42, 16
    %v44 = vpop.permute.xlu0 %43
    %vm45 = vcmask 261248
    %46 = vst.msk [vmem:[#allocation0] sm:$0x1] %vm45, %v44
    %s48 = sshllo.u32 0, 1
    %v50 = vld [vmem:[#allocation0] sm:%s48]
    %s51 = sshllo.u32 0, 1
    %52 = vst [vmem:[%s1] sm:%s51] %v50

// kernel: densenet_initial_layers.2
$region0: #{densenet_initial_layers.2}
  #allocation0 [shape = 'u32[]', space=smem, size = 0x4, offset = 0x4, fixed_abs, tag = 'smem constant byte address 0x4 - core index']
  #allocation1 [shape = 'u32[144,128]{1,0:T(1,128)}', space=vmem, size = 0x12000, scoped, tag = 'internal scratch']
  %s0 = inlined_call_operand.vmem [shape: f32[2,16,48], index: 0, kind: input, shape index: {}]
  %s1 = inlined_call_operand.vmem [shape: bf16[3,48,128], index: 1, kind: input, shape index: {}]
  %s2 = inlined_call_operand.vmem [shape: bf16[16,128], index: 2, kind: output, shape index: {0}]
  %s3 = inlined_call_operand.vmem [shape: f32[1,1,128], index: 3, kind: output, shape index: {1}]
  %s4 = inlined_call_operand.vmem [shape: f32[1,1,128], index: 4, kind: output, shape index: {2}]
  %5 = xla_tuple %s2, %s3, %s4
  %s6 = sld [smem:[#allocation0]]
  $region34: #{densenet_initial_layers.2} parent=0
    _
  %s8 = ssub.s32 1, %s6
  %s9 = scalar_select 0, %s8, %s6
  // Predicated region
  $region2: #{densenet_initial_layers.2} parent=0 // pred_check
    _
  $region3: #{densenet_initial_layers.2} parent=0 // pred_check_branch
    %11 = sbr.rel (0) target = $region5
  $region4: #{densenet_initial_layers.2} parent=0 // pred_region
    _
  $region5: #{densenet_initial_layers.2} parent=0 // pred_fallthru
    _
  // Predicated region
  $region6: #{densenet_initial_layers.2} parent=0 // pred_check
    _
  $region7: #{densenet_initial_layers.2} parent=0 // pred_check_branch
    %13 = sbr.rel (0) target = $region9
  $region8: #{densenet_initial_layers.2} parent=0 // pred_region
    _
  $region9: #{densenet_initial_layers.2} parent=0 // pred_fallthru
    _
  %v15 = vld [vmem:[%s0] sm:$0xff]
  %v16 = vld [vmem:[%s0 + $0x8] sm:$0xff]
  %s17 = scalar_lea.vmem %s0, 16
  %v18 = vld [vmem:[%s17] sm:$0xff]
  %v19 = vld [vmem:[%s17 + $0x8] sm:$0xff]
  %vm22 = vcmask 1040384
  %v23 = vrot.slane %v18, 7
  %v24 = vrot.slane %v19, 7
  %v25 = vsel %vm22, %v23, %v24
  %v28 = vsel %vm22, 0.0, %v23
  %v29 = vlaneseq
  %v30 = vshrl.u32 %v29, 7
  %v31 = vadd.s32 %v30, 8
  %vm32 = vcmp.lt.s32.totalorder %v30, 0
  %v33 = vsub.s32 0, %v30
  %v34 = vsel %vm32, %v33, %v30
  %v35 = vshrl.u32 %v34, 3
  %v36 = vand.u32 %v34, 7
  %v37 = vsub.s32 0, %v36
  %v38 = vsel %vm32, %v37, %v36
  %vm39 = vcmp.lt.s32.totalorder %v31, 0
  %v40 = vsub.s32 0, %v31
  %v41 = vsel %vm39, %v40, %v31
  %v42 = vshrl.u32 %v41, 3
  %v43 = vand.u32 %v41, 7
  %v44 = vsub.s32 0, %v43
  %v45 = vsel %vm39, %v44, %v43
  %vm46 = vcmp.ne.s32.totalorder %v38, 0
  %vm47 = vcmp.ne.s32.totalorder %v45, 0
  %vm48 = vcmp.lt.s32.totalorder %v38, 0
  %vm49 = vcmp.lt.s32.totalorder %v45, 0
  %vm50 = vmand %vm48, %vm46
  %vm51 = vmand %vm49, %vm47
  %v52 = vadd.s32 %v38, 8
  %v53 = vadd.s32 %v45, 8
  %v54 = vsel %vm50, %v52, %v38
  %v55 = vsel %vm51, %v53, %v45
  %vm56 = vcmp.eq.s32.totalorder %v54, 0
  %vm57 = vcmp.eq.s32.totalorder %v55, 0
  %v58 = vsel %vm56, 1, 0
  %v59 = vsel %vm57, 1, 0
  %vm60 = vcmp.eq.s32.totalorder %v58, 1
  %vm61 = vcmp.eq.s32.totalorder %v59, 1
  %v62 = vsel %vm60, 0.0, %v28
  %v63 = vsel %vm61, 0.0, %v25
  %v64 = vpack.c.bf16 %v63, %v62
  %v65 = vld [vmem:[%s1] sm:$0xf]
  %v66 = vld [vmem:[%s1 + $0x4] sm:$0xf]
  %v67 = vld [vmem:[%s1 + $0x8] sm:$0xf]
  %v68 = vld [vmem:[%s1 + $0xc] sm:$0xf]
  %v69 = vld [vmem:[%s1 + $0x10] sm:$0xf]
  %v70 = vld [vmem:[%s1 + $0x14] sm:$0xf]
  %v71 = vpack.c.bf16 %v16, %v15
  %s72 = scalar_lea.vmem %s1, 24
  %v73 = vld [vmem:[%s72] sm:$0xf]
  %v74 = vld [vmem:[%s72 + $0x4] sm:$0xf]
  %v75 = vld [vmem:[%s72 + $0x8] sm:$0xf]
  %v76 = vld [vmem:[%s72 + $0xc] sm:$0xf]
  %v77 = vld [vmem:[%s72 + $0x10] sm:$0xf]
  %v78 = vld [vmem:[%s72 + $0x14] sm:$0xf]
  %v85 = vunpack.c.l.b16 %v73
  %v86 = vunpack.c.l.b16 %v74
  %v87 = vunpack.c.l.b16 %v75
  %v88 = vunpack.c.l.b16 %v76
  %v89 = vunpack.c.l.b16 %v77
  %v90 = vunpack.c.l.b16 %v78
  %v91 = vpack.c.b16 %v86, %v85
  %v92 = vpack.c.b16 %v88, %v87
  %v93 = vpack.c.b16 %v90, %v89
  %vm97 = vcmask 392192
  %v99 = vsel %vm97, %v71, 0
  %101 = vmatprep.subr.bf16.mxu0 0
  %102 = vmatpush1.bf16.msra.mxu0 %v91
  %103 = vmatprep.subr.bf16.mxu0 0
  %104 = vmatpush1.bf16.msra.mxu0 %v92
  %105 = vmatprep.subr.bf16.mxu0 0
  %106 = vmatpush1.bf16.msra.mxu0 %v93
  %107 = vmatprep.subr.bf16.mxu0 0
  %108 = vmatpush1.bf16.msra.mxu0 0
  %109 = vmatprep.subr.bf16.mxu0 0
  %110 = vmatpush1.bf16.msra.mxu0 0
  %111 = vmatprep.subr.bf16.mxu0 0
  %112 = vmatpush1.bf16.msra.mxu0 0
  %113 = vmatprep.subr.bf16.mxu0 0
  %114 = vmatpush1.bf16.msra.mxu0 0
  %115 = vmatprep.subr.bf16.mxu0 0
  %116 = vmatpush1.bf16.msra.mxu0 0
  %117 = vmatprep.subr.bf16.mxu0 0
  %118 = vmatpush1.bf16.msra.mxu0 0
  %119 = vmatprep.subr.bf16.mxu0 0
  %120 = vmatpush1.bf16.msra.mxu0 0
  %121 = vmatprep.subr.bf16.mxu0 0
  %122 = vmatpush1.bf16.msra.mxu0 0
  %123 = vmatprep.subr.bf16.mxu0 0
  %124 = vmatpush1.bf16.msra.mxu0 0
  %125 = vmatprep.subr.bf16.mxu0 0
  %126 = vmatpush1.bf16.msra.mxu0 0
  %127 = vmatprep.subr.bf16.mxu0 0
  %128 = vmatpush1.bf16.msra.mxu0 0
  %129 = vmatprep.subr.bf16.mxu0 0
  %130 = vmatpush1.bf16.msra.mxu0 0
  %131 = vmatprep.subr.bf16.mxu0 0
  %132 = vmatpush1.bf16.msra.mxu0 0
  %133 = vmatprep.mubr.bf16.mxu0 0
  %134 = vmatmul.mubr.bf16.gmra.mrb[0].mxu0 %v99
  %v135 = vpop.f32.mrb[0].mxu0
  %v136 = vadd.f32 0.0, %v135
  %v137 = vpop.f32.mrb[0].mxu0
  %v138 = vpop.f32.mrb[0].mxu0
  %v139 = vadd.f32 0.0, %v138
  %v140 = vpop.f32.mrb[0].mxu0
  %141 = vdwg.mxu0
  %v148 = vunpack.c.l.b16 %v65
  %v149 = vunpack.c.l.b16 %v66
  %v150 = vunpack.c.l.b16 %v67
  %v151 = vunpack.c.l.b16 %v68
  %v152 = vunpack.c.l.b16 %v69
  %v153 = vunpack.c.l.b16 %v70
  %v154 = vpack.c.b16 %v149, %v148
  %v155 = vpack.c.b16 %v151, %v150
  %v156 = vpack.c.b16 %v153, %v152
  %v161 = vsel %vm97, %v64, 0
  %163 = vmatprep.subr.bf16.mxu0 0
  %164 = vmatpush1.bf16.msra.mxu0 %v154
  %165 = vmatprep.subr.bf16.mxu0 0
  %166 = vmatpush1.bf16.msra.mxu0 %v155
  %167 = vmatprep.subr.bf16.mxu0 0
  %168 = vmatpush1.bf16.msra.mxu0 %v156
  %169 = vmatprep.subr.bf16.mxu0 0
  %170 = vmatpush1.bf16.msra.mxu0 0
  %171 = vmatprep.subr.bf16.mxu0 0
  %172 = vmatpush1.bf16.msra.mxu0 0
  %173 = vmatprep.subr.bf16.mxu0 0
  %174 = vmatpush1.bf16.msra.mxu0 0
  %175 = vmatprep.subr.bf16.mxu0 0
  %176 = vmatpush1.bf16.msra.mxu0 0
  %177 = vmatprep.subr.bf16.mxu0 0
  %178 = vmatpush1.bf16.msra.mxu0 0
  %179 = vmatprep.subr.bf16.mxu0 0
  %180 = vmatpush1.bf16.msra.mxu0 0
  %181 = vmatprep.subr.bf16.mxu0 0
  %182 = vmatpush1.bf16.msra.mxu0 0
  %183 = vmatprep.subr.bf16.mxu0 0
  %184 = vmatpush1.bf16.msra.mxu0 0
  %185 = vmatprep.subr.bf16.mxu0 0
  %186 = vmatpush1.bf16.msra.mxu0 0
  %187 = vmatprep.subr.bf16.mxu0 0
  %188 = vmatpush1.bf16.msra.mxu0 0
  %189 = vmatprep.subr.bf16.mxu0 0
  %190 = vmatpush1.bf16.msra.mxu0 0
  %191 = vmatprep.subr.bf16.mxu0 0
  %192 = vmatpush1.bf16.msra.mxu0 0
  %193 = vmatprep.subr.bf16.mxu0 0
  %194 = vmatpush1.bf16.msra.mxu0 0
  %195 = vmatprep.mubr.bf16.mxu0 0
  %196 = vmatmul.mubr.bf16.gmra.mrb[0].mxu0 %v161
  %v197 = vpop.f32.mrb[0].mxu0
  %v198 = vadd.f32 %v136, %v197
  %v199 = vpop.f32.mrb[0].mxu0
  %v200 = vpop.f32.mrb[0].mxu0
  %v201 = vadd.f32 %v139, %v200
  %v202 = vpop.f32.mrb[0].mxu0
  %203 = vdwg.mxu0
  %v204 = vpack.c.bf16 %v19, %v18
  %s205 = scalar_lea.vmem %s1, 48
  %v206 = vld [vmem:[%s205] sm:$0xf]
  %v207 = vld [vmem:[%s205 + $0x4] sm:$0xf]
  %v208 = vld [vmem:[%s205 + $0x8] sm:$0xf]
  %v209 = vld [vmem:[%s205 + $0xc] sm:$0xf]
  %v210 = vld [vmem:[%s205 + $0x10] sm:$0xf]
  %v211 = vld [vmem:[%s205 + $0x14] sm:$0xf]
  %v218 = vunpack.c.l.b16 %v206
  %v219 = vunpack.c.l.b16 %v207
  %v220 = vunpack.c.l.b16 %v208
  %v221 = vunpack.c.l.b16 %v209
  %v222 = vunpack.c.l.b16 %v210
  %v223 = vunpack.c.l.b16 %v211
  %v224 = vpack.c.b16 %v219, %v218
  %v225 = vpack.c.b16 %v221, %v220
  %v226 = vpack.c.b16 %v223, %v222
  %v231 = vsel %vm97, %v204, 0
  %233 = vmatprep.subr.bf16.mxu0 0
  %234 = vmatpush1.bf16.msra.mxu0 %v224
  %235 = vmatprep.subr.bf16.mxu0 0
  %236 = vmatpush1.bf16.msra.mxu0 %v225
  %237 = vmatprep.subr.bf16.mxu0 0
  %238 = vmatpush1.bf16.msra.mxu0 %v226
  %239 = vmatprep.subr.bf16.mxu0 0
  %240 = vmatpush1.bf16.msra.mxu0 0
  %241 = vmatprep.subr.bf16.mxu0 0
  %242 = vmatpush1.bf16.msra.mxu0 0
  %243 = vmatprep.subr.bf16.mxu0 0
  %244 = vmatpush1.bf16.msra.mxu0 0
  %245 = vmatprep.subr.bf16.mxu0 0
  %246 = vmatpush1.bf16.msra.mxu0 0
  %247 = vmatprep.subr.bf16.mxu0 0
  %248 = vmatpush1.bf16.msra.mxu0 0
  %249 = vmatprep.subr.bf16.mxu0 0
  %250 = vmatpush1.bf16.msra.mxu0 0
  %251 = vmatprep.subr.bf16.mxu0 0
  %252 = vmatpush1.bf16.msra.mxu0 0
  %253 = vmatprep.subr.bf16.mxu0 0
  %254 = vmatpush1.bf16.msra.mxu0 0
  %255 = vmatprep.subr.bf16.mxu0 0
  %256 = vmatpush1.bf16.msra.mxu0 0
  %257 = vmatprep.subr.bf16.mxu0 0
  %258 = vmatpush1.bf16.msra.mxu0 0
  %259 = vmatprep.subr.bf16.mxu0 0
  %260 = vmatpush1.bf16.msra.mxu0 0
  %261 = vmatprep.subr.bf16.mxu0 0
  %262 = vmatpush1.bf16.msra.mxu0 0
  %263 = vmatprep.subr.bf16.mxu0 0
  %264 = vmatpush1.bf16.msra.mxu0 0
  %265 = vmatprep.mubr.bf16.mxu0 0
  %266 = vmatmul.mubr.bf16.gmra.mrb[0].mxu0 %v231
  %v267 = vpop.f32.mrb[0].mxu0
  %v268 = vadd.f32 0.0, %v267
  %v269 = vpop.f32.mrb[0].mxu0
  %v270 = vpop.f32.mrb[0].mxu0
  %v271 = vadd.f32 0.0, %v270
  %v272 = vpop.f32.mrb[0].mxu0
  %273 = vdwg.mxu0
  %v274 = vadd.f32 %v198, %v268
  %v275 = vadd.f32 %v201, %v271
  %v276 = vpack.c.bf16 %v275, %v274
  %v278 = vunpack.c.l.b16 %v276
  %v279 = vunpack.c.h.b16 %v276
  %v280 = vpack.c.b16 %v278, %v278
  %v281 = vpack.c.b16 %v279, %v279
  %284 = vst [vmem:[%s2] sm:$0xf] %v280
  %285 = vst [vmem:[%s2 + $0x4] sm:$0xf] %v281
  %v286 = vadd.f32 %v274, %v275
  %v287 = vrot.slane %v286, 4
  %v288 = vadd.f32 %v286, %v287
  %v289 = vrot.slane %v288, 2
  %v290 = vadd.f32 %v288, %v289
  %v291 = vrot.slane %v290, 1
  %v292 = vadd.f32 %v290, %v291
  %293 = vst [vmem:[%s3] sm:$0x1] %v292
  %v294 = vmul.f32 %v274, %v274
  %v295 = vmul.f32 %v275, %v275
  %v296 = vadd.f32 %v294, %v295
  %v297 = vrot.slane %v296, 4
  %v298 = vadd.f32 %v296, %v297
  %v299 = vrot.slane %v298, 2
  %v300 = vadd.f32 %v298, %v299
  %v301 = vrot.slane %v300, 1
  %v302 = vadd.f32 %v300, %v301
  %303 = vst [vmem:[%s4] sm:$0x1] %v302
  // Predicated region
  $region10: #{densenet_initial_layers.2} parent=0 // pred_check
    _
  $region11: #{densenet_initial_layers.2} parent=0 // pred_check_branch
    %305 = sbr.rel (0) target = $region13
  $region12: #{densenet_initial_layers.2} parent=0 // pred_region
    _
  $region13: #{densenet_initial_layers.2} parent=0 // pred_fallthru
    _
  // Predicated region
  $region14: #{densenet_initial_layers.2} parent=0 // pred_check
    _
  $region15: #{densenet_initial_layers.2} parent=0 // pred_check_branch
    %307 = sbr.rel (0) target = $region17
  $region16: #{densenet_initial_layers.2} parent=0 // pred_region
    _
  $region17: #{densenet_initial_layers.2} parent=0 // pred_fallthru
    _
  // Predicated region
  $region18: #{densenet_initial_layers.2} parent=0 // pred_check
    _
  $region19: #{densenet_initial_layers.2} parent=0 // pred_check_branch
    %309 = sbr.rel (0) target = $region21
  $region20: #{densenet_initial_layers.2} parent=0 // pred_region
    _
  $region21: #{densenet_initial_layers.2} parent=0 // pred_fallthru
    _
  // Predicated region
  $region22: #{densenet_initial_layers.2} parent=0 // pred_check
    _
  $region23: #{densenet_initial_layers.2} parent=0 // pred_check_branch
    %311 = sbr.rel (0) target = $region25
  $region24: #{densenet_initial_layers.2} parent=0 // pred_region
    _
  $region25: #{densenet_initial_layers.2} parent=0 // pred_fallthru
    _
  // Predicated region
  $region26: #{densenet_initial_layers.2} parent=0 // pred_check
    _
  $region27: #{densenet_initial_layers.2} parent=0 // pred_check_branch
    %313 = sbr.rel (0) target = $region29
  $region28: #{densenet_initial_layers.2} parent=0 // pred_region
    _
  $region29: #{densenet_initial_layers.2} parent=0 // pred_fallthru
    _
  // Predicated region
  $region30: #{densenet_initial_layers.2} parent=0 // pred_check
    _
  $region31: #{densenet_initial_layers.2} parent=0 // pred_check_branch
    %315 = sbr.rel (0) target = $region33
  $region32: #{densenet_initial_layers.2} parent=0 // pred_region
    _
  $region33: #{densenet_initial_layers.2} parent=0 // pred_fallthru
    _

// kernel: densenet_initial_layers.3
$region0: #{densenet_initial_layers.3}
  #allocation0 [shape = 'u32[]', space=smem, size = 0x4, offset = 0x4, fixed_abs, tag = 'smem constant byte address 0x4 - core index']
  #allocation1 [shape = 'u32[144,128]{1,0:T(1,128)}', space=vmem, size = 0x12000, scoped, tag = 'internal scratch']
  %s0 = inlined_call_operand.vmem [shape: bf16[2,8,128], index: 0, kind: input, shape index: {}]
  %s1 = inlined_call_operand.vmem [shape: f32[1,128], index: 1, kind: input, shape index: {}]
  %s2 = inlined_call_operand.vmem [shape: f32[1,128], index: 2, kind: input, shape index: {}]
  %s3 = inlined_call_operand.vmem [shape: bf16[3,128,128], index: 3, kind: input, shape index: {}]
  %s4 = inlined_call_operand.vmem [shape: f32[2,8,128], index: 4, kind: output, shape index: {0}]
  %s5 = inlined_call_operand.vmem [shape: f32[8,128], index: 5, kind: output, shape index: {1}]
  %6 = xla_tuple %s4, %s5
  %s7 = sld [smem:[#allocation0]]
  $region34: #{densenet_initial_layers.3} parent=0
    _
  %s9 = ssub.s32 1, %s7
  %s10 = scalar_select 0, %s9, %s7
  // Predicated region
  $region2: #{densenet_initial_layers.3} parent=0 // pred_check
    _
  $region3: #{densenet_initial_layers.3} parent=0 // pred_check_branch
    %12 = sbr.rel (0) target = $region5
  $region4: #{densenet_initial_layers.3} parent=0 // pred_region
    _
  $region5: #{densenet_initial_layers.3} parent=0 // pred_fallthru
    _
  // Predicated region
  $region6: #{densenet_initial_layers.3} parent=0 // pred_check
    _
  $region7: #{densenet_initial_layers.3} parent=0 // pred_check_branch
    %14 = sbr.rel (0) target = $region9
  $region8: #{densenet_initial_layers.3} parent=0 // pred_region
    _
  $region9: #{densenet_initial_layers.3} parent=0 // pred_fallthru
    _
  // Predicated region
  $region10: #{densenet_initial_layers.3} parent=0 // pred_check
    _
  $region11: #{densenet_initial_layers.3} parent=0 // pred_check_branch
    %16 = sbr.rel (0) target = $region13
  $region12: #{densenet_initial_layers.3} parent=0 // pred_region
    _
  $region13: #{densenet_initial_layers.3} parent=0 // pred_fallthru
    _
  // Predicated region
  $region14: #{densenet_initial_layers.3} parent=0 // pred_check
    _
  $region15: #{densenet_initial_layers.3} parent=0 // pred_check_branch
    %18 = sbr.rel (0) target = $region17
  $region16: #{densenet_initial_layers.3} parent=0 // pred_region
    _
  $region17: #{densenet_initial_layers.3} parent=0 // pred_fallthru
    _
  %v20 = vld [vmem:[%s1] sm:$0x1]
  %v21 = vld [vmem:[%s2] sm:$0x1]
  %v22 = vld [vmem:[%s0] sm:$0xf]
  %v23 = vunpack.c.l.bf16 %v22
  %v25 = vlaneseq
  %v26 = vshrl.u32 %v25, 7
  %v27 = vsub.s32 0, %v26
  %v28 = vrot.slane %v20, %v27
  %v30 = vmul.f32 %v23, %v28
  %v32 = vlaneseq
  %v33 = vshrl.u32 %v32, 7
  %v34 = vsub.s32 0, %v33
  %v35 = vrot.slane %v21, %v34
  %v37 = vadd.f32 %v30, %v35
  %v38 = vmax.f32 %v37, 0.0
  %s39 = scalar_lea.vmem %s0, 4
  %v40 = vld [vmem:[%s39] sm:$0xf]
  %v41 = vunpack.c.l.bf16 %v40
  %v42 = vmul.f32 %v41, %v28
  %v43 = vadd.f32 %v42, %v35
  %v44 = vmax.f32 %v43, 0.0
  %45 = vst [vmem:[%s4] sm:$0xff] %v38
  %s46 = scalar_lea.vmem %s4, 8
  %47 = vst [vmem:[%s46] sm:$0xff] %v44
  %v49 = vrot.slane %v44, 7
  %vm51 = vcmask 1040384
  %v52 = vsel %vm51, 0.0, %v49
  %v53 = vlaneseq
  %v54 = vshrl.u32 %v53, 7
  %vm55 = vcmp.lt.s32.totalorder %v54, 0
  %v56 = vsub.s32 0, %v54
  %v57 = vsel %vm55, %v56, %v54
  %v58 = vshrl.u32 %v57, 2
  %v59 = vand.u32 %v57, 3
  %v60 = vsub.s32 0, %v59
  %v61 = vsel %vm55, %v60, %v59
  %vm62 = vcmp.ne.s32.totalorder %v61, 0
  %vm63 = vcmp.lt.s32.totalorder %v61, 0
  %vm64 = vmand %vm63, %vm62
  %v65 = vadd.s32 %v61, 4
  %v66 = vsel %vm64, %v65, %v61
  %vm67 = vcmp.eq.s32.totalorder %v66, 0
  %v68 = vsel %vm67, 1, 0
  %vm69 = vcmp.eq.s32.totalorder %v68, 1
  %v70 = vsel %vm69, 0.0, %v52
  %v71 = vpack.c.bf16 %v70, %v70
  %v72 = vld [vmem:[%s3] sm:$0xf]
  %v73 = vld [vmem:[%s3 + $0x4] sm:$0xf]
  %v74 = vld [vmem:[%s3 + $0x8] sm:$0xf]
  %v75 = vld [vmem:[%s3 + $0xc] sm:$0xf]
  %v76 = vld [vmem:[%s3 + $0x10] sm:$0xf]
  %v77 = vld [vmem:[%s3 + $0x14] sm:$0xf]
  %v78 = vld [vmem:[%s3 + $0x18] sm:$0xf]
  %v79 = vld [vmem:[%s3 + $0x1c] sm:$0xf]
  %v80 = vld [vmem:[%s3 + $0x20] sm:$0xf]
  %v81 = vld [vmem:[%s3 + $0x24] sm:$0xf]
  %v82 = vld [vmem:[%s3 + $0x28] sm:$0xf]
  %v83 = vld [vmem:[%s3 + $0x2c] sm:$0xf]
  %v84 = vld [vmem:[%s3 + $0x30] sm:$0xf]
  %v85 = vld [vmem:[%s3 + $0x34] sm:$0xf]
  %v86 = vld [vmem:[%s3 + $0x38] sm:$0xf]
  %v87 = vld [vmem:[%s3 + $0x3c] sm:$0xf]
  %v88 = vpack.c.bf16 %v38, %v38
  %s89 = scalar_lea.vmem %s3, 64
  %v90 = vld [vmem:[%s89] sm:$0xf]
  %v91 = vld [vmem:[%s89 + $0x4] sm:$0xf]
  %v92 = vld [vmem:[%s89 + $0x8] sm:$0xf]
  %v93 = vld [vmem:[%s89 + $0xc] sm:$0xf]
  %v94 = vld [vmem:[%s89 + $0x10] sm:$0xf]
  %v95 = vld [vmem:[%s89 + $0x14] sm:$0xf]
  %v96 = vld [vmem:[%s89 + $0x18] sm:$0xf]
  %v97 = vld [vmem:[%s89 + $0x1c] sm:$0xf]
  %v98 = vld [vmem:[%s89 + $0x20] sm:$0xf]
  %v99 = vld [vmem:[%s89 + $0x24] sm:$0xf]
  %v100 = vld [vmem:[%s89 + $0x28] sm:$0xf]
  %v101 = vld [vmem:[%s89 + $0x2c] sm:$0xf]
  %v102 = vld [vmem:[%s89 + $0x30] sm:$0xf]
  %v103 = vld [vmem:[%s89 + $0x34] sm:$0xf]
  %v104 = vld [vmem:[%s89 + $0x38] sm:$0xf]
  %v105 = vld [vmem:[%s89 + $0x3c] sm:$0xf]
  %v122 = vunpack.c.l.b16 %v90
  %v123 = vunpack.c.l.b16 %v91
  %v124 = vunpack.c.l.b16 %v92
  %v125 = vunpack.c.l.b16 %v93
  %v126 = vunpack.c.l.b16 %v94
  %v127 = vunpack.c.l.b16 %v95
  %v128 = vunpack.c.l.b16 %v96
  %v129 = vunpack.c.l.b16 %v97
  %v130 = vunpack.c.l.b16 %v98
  %v131 = vunpack.c.l.b16 %v99
  %v132 = vunpack.c.l.b16 %v100
  %v133 = vunpack.c.l.b16 %v101
  %v134 = vunpack.c.l.b16 %v102
  %v135 = vunpack.c.l.b16 %v103
  %v136 = vunpack.c.l.b16 %v104
  %v137 = vunpack.c.l.b16 %v105
  %v138 = vpack.c.b16 %v123, %v122
  %v139 = vpack.c.b16 %v125, %v124
  %v140 = vpack.c.b16 %v127, %v126
  %v141 = vpack.c.b16 %v129, %v128
  %v142 = vpack.c.b16 %v131, %v130
  %v143 = vpack.c.b16 %v133, %v132
  %v144 = vpack.c.b16 %v135, %v134
  %v145 = vpack.c.b16 %v137, %v136
  %154 = vmatprep.subr.bf16.mxu0 0
  %155 = vmatpush1.bf16.msra.mxu0 %v138
  %156 = vmatprep.subr.bf16.mxu0 0
  %157 = vmatpush1.bf16.msra.mxu0 %v139
  %158 = vmatprep.subr.bf16.mxu0 0
  %159 = vmatpush1.bf16.msra.mxu0 %v140
  %160 = vmatprep.subr.bf16.mxu0 0
  %161 = vmatpush1.bf16.msra.mxu0 %v141
  %162 = vmatprep.subr.bf16.mxu0 0
  %163 = vmatpush1.bf16.msra.mxu0 %v142
  %164 = vmatprep.subr.bf16.mxu0 0
  %165 = vmatpush1.bf16.msra.mxu0 %v143
  %166 = vmatprep.subr.bf16.mxu0 0
  %167 = vmatpush1.bf16.msra.mxu0 %v144
  %168 = vmatprep.subr.bf16.mxu0 0
  %169 = vmatpush1.bf16.msra.mxu0 %v145
  %170 = vmatprep.subr.bf16.mxu0 0
  %171 = vmatpush1.bf16.msra.mxu0 0
  %172 = vmatprep.subr.bf16.mxu0 0
  %173 = vmatpush1.bf16.msra.mxu0 0
  %174 = vmatprep.subr.bf16.mxu0 0
  %175 = vmatpush1.bf16.msra.mxu0 0
  %176 = vmatprep.subr.bf16.mxu0 0
  %177 = vmatpush1.bf16.msra.mxu0 0
  %178 = vmatprep.subr.bf16.mxu0 0
  %179 = vmatpush1.bf16.msra.mxu0 0
  %180 = vmatprep.subr.bf16.mxu0 0
  %181 = vmatpush1.bf16.msra.mxu0 0
  %182 = vmatprep.subr.bf16.mxu0 0
  %183 = vmatpush1.bf16.msra.mxu0 0
  %184 = vmatprep.subr.bf16.mxu0 0
  %185 = vmatpush1.bf16.msra.mxu0 0
  %186 = vmatprep.mubr.bf16.mxu0 0
  %187 = vmatmul.mubr.bf16.gmra.mrb[0].mxu0 %v88
  %v188 = vpop.f32.mrb[0].mxu0
  %v189 = vadd.f32 0.0, %v188
  %v190 = vpop.f32.mrb[0].mxu0
  %v191 = vpop.f32.mrb[0].mxu0
  %v192 = vpop.f32.mrb[0].mxu0
  %193 = vdwg.mxu0
  %v210 = vunpack.c.l.b16 %v72
  %v211 = vunpack.c.l.b16 %v73
  %v212 = vunpack.c.l.b16 %v74
  %v213 = vunpack.c.l.b16 %v75
  %v214 = vunpack.c.l.b16 %v76
  %v215 = vunpack.c.l.b16 %v77
  %v216 = vunpack.c.l.b16 %v78
  %v217 = vunpack.c.l.b16 %v79
  %v218 = vunpack.c.l.b16 %v80
  %v219 = vunpack.c.l.b16 %v81
  %v220 = vunpack.c.l.b16 %v82
  %v221 = vunpack.c.l.b16 %v83
  %v222 = vunpack.c.l.b16 %v84
  %v223 = vunpack.c.l.b16 %v85
  %v224 = vunpack.c.l.b16 %v86
  %v225 = vunpack.c.l.b16 %v87
  %v226 = vpack.c.b16 %v211, %v210
  %v227 = vpack.c.b16 %v213, %v212
  %v228 = vpack.c.b16 %v215, %v214
  %v229 = vpack.c.b16 %v217, %v216
  %v230 = vpack.c.b16 %v219, %v218
  %v231 = vpack.c.b16 %v221, %v220
  %v232 = vpack.c.b16 %v223, %v222
  %v233 = vpack.c.b16 %v225, %v224
  %242 = vmatprep.subr.bf16.mxu0 0
  %243 = vmatpush1.bf16.msra.mxu0 %v226
  %244 = vmatprep.subr.bf16.mxu0 0
  %245 = vmatpush1.bf16.msra.mxu0 %v227
  %246 = vmatprep.subr.bf16.mxu0 0
  %247 = vmatpush1.bf16.msra.mxu0 %v228
  %248 = vmatprep.subr.bf16.mxu0 0
  %249 = vmatpush1.bf16.msra.mxu0 %v229
  %250 = vmatprep.subr.bf16.mxu0 0
  %251 = vmatpush1.bf16.msra.mxu0 %v230
  %252 = vmatprep.subr.bf16.mxu0 0
  %253 = vmatpush1.bf16.msra.mxu0 %v231
  %254 = vmatprep.subr.bf16.mxu0 0
  %255 = vmatpush1.bf16.msra.mxu0 %v232
  %256 = vmatprep.subr.bf16.mxu0 0
  %257 = vmatpush1.bf16.msra.mxu0 %v233
  %258 = vmatprep.subr.bf16.mxu0 0
  %259 = vmatpush1.bf16.msra.mxu0 0
  %260 = vmatprep.subr.bf16.mxu0 0
  %261 = vmatpush1.bf16.msra.mxu0 0
  %262 = vmatprep.subr.bf16.mxu0 0
  %263 = vmatpush1.bf16.msra.mxu0 0
  %264 = vmatprep.subr.bf16.mxu0 0
  %265 = vmatpush1.bf16.msra.mxu0 0
  %266 = vmatprep.subr.bf16.mxu0 0
  %267 = vmatpush1.bf16.msra.mxu0 0
  %268 = vmatprep.subr.bf16.mxu0 0
  %269 = vmatpush1.bf16.msra.mxu0 0
  %270 = vmatprep.subr.bf16.mxu0 0
  %271 = vmatpush1.bf16.msra.mxu0 0
  %272 = vmatprep.subr.bf16.mxu0 0
  %273 = vmatpush1.bf16.msra.mxu0 0
  %274 = vmatprep.mubr.bf16.mxu0 0
  %275 = vmatmul.mubr.bf16.gmra.mrb[0].mxu0 %v71
  %v276 = vpop.f32.mrb[0].mxu0
  %v277 = vadd.f32 %v189, %v276
  %v278 = vpop.f32.mrb[0].mxu0
  %v279 = vpop.f32.mrb[0].mxu0
  %v280 = vpop.f32.mrb[0].mxu0
  %281 = vdwg.mxu0
  %v282 = vpack.c.bf16 %v44, %v44
  %s283 = scalar_lea.vmem %s3, 128
  %v284 = vld [vmem:[%s283] sm:$0xf]
  %v285 = vld [vmem:[%s283 + $0x4] sm:$0xf]
  %v286 = vld [vmem:[%s283 + $0x8] sm:$0xf]
  %v287 = vld [vmem:[%s283 + $0xc] sm:$0xf]
  %v288 = vld [vmem:[%s283 + $0x10] sm:$0xf]
  %v289 = vld [vmem:[%s283 + $0x14] sm:$0xf]
  %v290 = vld [vmem:[%s283 + $0x18] sm:$0xf]
  %v291 = vld [vmem:[%s283 + $0x1c] sm:$0xf]
  %v292 = vld [vmem:[%s283 + $0x20] sm:$0xf]
  %v293 = vld [vmem:[%s283 + $0x24] sm:$0xf]
  %v294 = vld [vmem:[%s283 + $0x28] sm:$0xf]
  %v295 = vld [vmem:[%s283 + $0x2c] sm:$0xf]
  %v296 = vld [vmem:[%s283 + $0x30] sm:$0xf]
  %v297 = vld [vmem:[%s283 + $0x34] sm:$0xf]
  %v298 = vld [vmem:[%s283 + $0x38] sm:$0xf]
  %v299 = vld [vmem:[%s283 + $0x3c] sm:$0xf]
  %v316 = vunpack.c.l.b16 %v284
  %v317 = vunpack.c.l.b16 %v285
  %v318 = vunpack.c.l.b16 %v286
  %v319 = vunpack.c.l.b16 %v287
  %v320 = vunpack.c.l.b16 %v288
  %v321 = vunpack.c.l.b16 %v289
  %v322 = vunpack.c.l.b16 %v290
  %v323 = vunpack.c.l.b16 %v291
  %v324 = vunpack.c.l.b16 %v292
  %v325 = vunpack.c.l.b16 %v293
  %v326 = vunpack.c.l.b16 %v294
  %v327 = vunpack.c.l.b16 %v295
  %v328 = vunpack.c.l.b16 %v296
  %v329 = vunpack.c.l.b16 %v297
  %v330 = vunpack.c.l.b16 %v298
  %v331 = vunpack.c.l.b16 %v299
  %v332 = vpack.c.b16 %v317, %v316
  %v333 = vpack.c.b16 %v319, %v318
  %v334 = vpack.c.b16 %v321, %v320
  %v335 = vpack.c.b16 %v323, %v322
  %v336 = vpack.c.b16 %v325, %v324
  %v337 = vpack.c.b16 %v327, %v326
  %v338 = vpack.c.b16 %v329, %v328
  %v339 = vpack.c.b16 %v331, %v330
  %348 = vmatprep.subr.bf16.mxu0 0
  %349 = vmatpush1.bf16.msra.mxu0 %v332
  %350 = vmatprep.subr.bf16.mxu0 0
  %351 = vmatpush1.bf16.msra.mxu0 %v333
  %352 = vmatprep.subr.bf16.mxu0 0
  %353 = vmatpush1.bf16.msra.mxu0 %v334
  %354 = vmatprep.subr.bf16.mxu0 0
  %355 = vmatpush1.bf16.msra.mxu0 %v335
  %356 = vmatprep.subr.bf16.mxu0 0
  %357 = vmatpush1.bf16.msra.mxu0 %v336
  %358 = vmatprep.subr.bf16.mxu0 0
  %359 = vmatpush1.bf16.msra.mxu0 %v337
  %360 = vmatprep.subr.bf16.mxu0 0
  %361 = vmatpush1.bf16.msra.mxu0 %v338
  %362 = vmatprep.subr.bf16.mxu0 0
  %363 = vmatpush1.bf16.msra.mxu0 %v339
  %364 = vmatprep.subr.bf16.mxu0 0
  %365 = vmatpush1.bf16.msra.mxu0 0
  %366 = vmatprep.subr.bf16.mxu0 0
  %367 = vmatpush1.bf16.msra.mxu0 0
  %368 = vmatprep.subr.bf16.mxu0 0
  %369 = vmatpush1.bf16.msra.mxu0 0
  %370 = vmatprep.subr.bf16.mxu0 0
  %371 = vmatpush1.bf16.msra.mxu0 0
  %372 = vmatprep.subr.bf16.mxu0 0
  %373 = vmatpush1.bf16.msra.mxu0 0
  %374 = vmatprep.subr.bf16.mxu0 0
  %375 = vmatpush1.bf16.msra.mxu0 0
  %376 = vmatprep.subr.bf16.mxu0 0
  %377 = vmatpush1.bf16.msra.mxu0 0
  %378 = vmatprep.subr.bf16.mxu0 0
  %379 = vmatpush1.bf16.msra.mxu0 0
  %380 = vmatprep.mubr.bf16.mxu0 0
  %381 = vmatmul.mubr.bf16.gmra.mrb[0].mxu0 %v282
  %v382 = vpop.f32.mrb[0].mxu0
  %v383 = vadd.f32 0.0, %v382
  %v384 = vpop.f32.mrb[0].mxu0
  %v385 = vpop.f32.mrb[0].mxu0
  %v386 = vpop.f32.mrb[0].mxu0
  %387 = vdwg.mxu0
  %v388 = vadd.f32 %v277, %v383
  %389 = vst [vmem:[%s5] sm:$0xff] %v388
  // Predicated region
  $region18: #{densenet_initial_layers.3} parent=0 // pred_check
    _
  $region19: #{densenet_initial_layers.3} parent=0 // pred_check_branch
    %391 = sbr.rel (0) target = $region21
  $region20: #{densenet_initial_layers.3} parent=0 // pred_region
    _
  $region21: #{densenet_initial_layers.3} parent=0 // pred_fallthru
    _
  // Predicated region
  $region22: #{densenet_initial_layers.3} parent=0 // pred_check
    _
  $region23: #{densenet_initial_layers.3} parent=0 // pred_check_branch
    %393 = sbr.rel (0) target = $region25
  $region24: #{densenet_initial_layers.3} parent=0 // pred_region
    _
  $region25: #{densenet_initial_layers.3} parent=0 // pred_fallthru
    _
  // Predicated region
  $region26: #{densenet_initial_layers.3} parent=0 // pred_check
    _
  $region27: #{densenet_initial_layers.3} parent=0 // pred_check_branch
    %395 = sbr.rel (0) target = $region29
  $region28: #{densenet_initial_layers.3} parent=0 // pred_region
    _
  $region29: #{densenet_initial_layers.3} parent=0 // pred_fallthru
    _
  // Predicated region
  $region30: #{densenet_initial_layers.3} parent=0 // pred_check
    _
  $region31: #{densenet_initial_layers.3} parent=0 // pred_check_branch
    %397 = sbr.rel (0) target = $region33
  $region32: #{densenet_initial_layers.3} parent=0 // pred_region
    _
  $region33: #{densenet_initial_layers.3} parent=0 // pred_fallthru
    _

</llo_original>
